<compile_context>
chip_gen: v7x
topology: tpu7x:2x2x1
jax: 0.10.0
libtpu: 0.0.40
codegen_flags: <defaults>
</compile_context>

<pallas_src>
import functools

import jax
import jax.numpy as jnp
from jax.experimental import pallas as pl
from jax.experimental.pallas import tpu as pltpu

ALPHA = 1.0
SUBLANE = 8


def _round_up(n, m):
    return ((n + m - 1) // m) * m


def _vmem_limit_bytes():
    # v5e / v6e have 128 MiB physical VMEM -> allow bigger batch tiles.
    # Default stays at 32 MiB which is safe on v7x (64 MiB physical).
    try:
        kind = jax.devices()[0].device_kind.lower()
    except Exception:
        kind = ""
    if ("v6" in kind) or ("v5e" in kind) or ("v5 lite" in kind) or ("v5litepod" in kind):
        return 64 << 20
    return 32 << 20


def _adaptive_clustering_kernel(x_ref, w1_ref, b1_ref, w2_ref, b2_ref,
                                mu_t_ref, mu_sq_ref, z_ref, q_ref, *, alpha):
    # ---- encoder: Linear + ReLU ----
    # Weights are already bf16 (resident, grid-invariant); only the streamed
    # activations are cast per tile. Accumulation is f32 on the MXU.
    x = x_ref[...].astype(jnp.bfloat16)
    h = jnp.dot(x, w1_ref[...], preferred_element_type=jnp.float32) + b1_ref[...]
    h = jnp.maximum(h, 0.0)

    # ---- _enc_mu: Linear ----
    z = jnp.dot(h.astype(jnp.bfloat16), w2_ref[...],
                preferred_element_type=jnp.float32) + b2_ref[...]
    z_ref[...] = z.astype(z_ref.dtype)

    # ---- Student-t soft assignment ----
    # sum((z - mu)^2) == ||z||^2 + ||mu||^2 - 2 z@mu^T.
    # ||mu||^2 is hoisted to the wrapper; mu is pre-transposed -> plain NN matmul.
    # NOTE: the cross term uses bf16 MXU operands; for very large-norm embeddings
    # the cancellation error is O(||z||^2 * 2^-8) (clamped at 0 below).
    z_sq = jnp.sum(z * z, axis=1, keepdims=True)                       # (TB, 1) f32
    cross = jnp.dot(z.astype(jnp.bfloat16), mu_t_ref[...],
                    preferred_element_type=jnp.float32)                # (TB, K) f32
    dist = jnp.maximum(z_sq + mu_sq_ref[...] - 2.0 * cross, 0.0)

    # 1 / (1 + dist/alpha): constant-fold /alpha, reciprocal on the EUP (free slot).
    q = pl.reciprocal(1.0 + dist * (1.0 / alpha), approx=True)

    # q ** (alpha + 1) / 2 : the /2 cancels after row normalization; for alpha=1
    # the pow is a single VPU multiply.
    exponent = alpha + 1.0
    if exponent == 2.0:
        q = q * q
    else:
        q = q ** exponent

    # Exact row normalization (rows sum to 1 to f32 precision; matters for the
    # downstream DEC target distribution / KL loss).
    q_ref[...] = (q / jnp.sum(q, axis=1, keepdims=True)).astype(q_ref.dtype)


def adaptive_clustering_forward(x, w1, b1, w2, b2, mu, *, alpha=ALPHA,
                                block_b=1024):
    B, D = x.shape
    H = w1.shape[1]
    Z = w2.shape[1]
    K = mu.shape[0]

    # Batch tile: multiple of 8 sublanes; aim for >=2 grid steps when B > 8 so
    # dimension_semantics=("parallel",) can shard the batch across TCs (v7x).
    b_pad8 = _round_up(B, SUBLANE)
    TB = min(block_b, b_pad8)
    if b_pad8 > SUBLANE:
        TB = min(TB, _round_up((b_pad8 + 1) // 2, SUBLANE))
    Bp = _round_up(B, TB)

    f32 = jnp.float32
    bf16 = jnp.bfloat16

    # Only the batch axis is padded (and only when needed). Feature dims keep
    # their true widths: BlockSpec blocks equal to the full trailing dims are
    # legal, avoiding extra HBM pad/slice passes and output write amplification.
    x_in = x.astype(f32)
    if Bp != B:
        x_in = jnp.zeros((Bp, D), f32).at[:B].set(x_in)

    w1_b = w1.astype(bf16)                                    # (D, H) resident bf16
    w2_b = w2.astype(bf16)                                    # (H, Z) resident bf16
    mu_t = mu.astype(bf16).T                                  # (Z, K) pre-transposed
    mu_sq = jnp.sum(mu.astype(f32) ** 2, axis=1)[None, :]     # (1, K) hoisted ||mu||^2
    b1_r = b1.astype(f32).reshape(1, H)
    b2_r = b2.astype(f32).reshape(1, Z)

    invariant = lambda shape: pl.BlockSpec(shape, lambda i: (0, 0))
    batch_tile = lambda cols: pl.BlockSpec((TB, cols), lambda i: (i, 0))

    kernel = functools.partial(_adaptive_clustering_kernel, alpha=alpha)

    z_p, q_p = pl.pallas_call(
        kernel,
        grid=(Bp // TB,),
        out_shape=(
            jax.ShapeDtypeStruct((Bp, Z), f32),   # z  (true width)
            jax.ShapeDtypeStruct((Bp, K), f32),   # q  (true width)
        ),
        in_specs=[
            batch_tile(D),        # x        (pipelined per batch tile)
            invariant((D, H)),    # W1 bf16  (resident in VMEM)
            invariant((1, H)),    # b1 f32
            invariant((H, Z)),    # W2 bf16
            invariant((1, Z)),    # b2 f32
            invariant((Z, K)),    # mu^T bf16
            invariant((1, K)),    # ||mu||^2 f32
        ],
        out_specs=(batch_tile(Z), batch_tile(K)),
        compiler_params=pltpu.CompilerParams(
            dimension_semantics=("parallel",),
            vmem_limit_bytes=_vmem_limit_bytes(),
        ),
    )(x_in, w1_b, b1_r, w2_b, b2_r, mu_t, mu_sq)

    if Bp != B:
        z_p, q_p = z_p[:B], q_p[:B]
    return z_p, q_p


def reference_forward(x, w1, b1, w2, b2, mu, alpha=ALPHA):
    # Pure-f32 reference mirroring the PyTorch module's forward().
    h = jnp.maximum(x @ w1 + b1, 0.0)
    z = h @ w2 + b2
    dist = jnp.sum((z[:, None, :] - mu[None, :, :]) ** 2, axis=2)
    q = 1.0 / (1.0 + dist / alpha)
    q = q ** (alpha + 1.0) / 2.0
    q = q / jnp.sum(q, axis=1, keepdims=True)
    return z, q


if __name__ == "__main__":
    # Small shapes consistent with the module: input_dim -> hidden -> z_dim, K clusters.
    B, D_IN, HIDDEN, Z_DIM, K = 8, 64, 32, 16, 8

    key = jax.random.PRNGKey(0)
    kx, k1, k2, k3, k4, k5 = jax.random.split(key, 6)

    x = jax.random.normal(kx, (B, D_IN), dtype=jnp.float32)
    # Deterministic synthetic parameters (nn.Linear weights stored as (in, out)).
    w1 = jax.random.normal(k1, (D_IN, HIDDEN), dtype=jnp.float32) * 0.1
    b1 = jax.random.normal(k2, (1, HIDDEN), dtype=jnp.float32) * 0.01
    w2 = jax.random.normal(k3, (HIDDEN, Z_DIM), dtype=jnp.float32) * 0.1
    b2 = jax.random.normal(k4, (1, Z_DIM), dtype=jnp.float32) * 0.01
    mu = jax.random.normal(k5, (K, Z_DIM), dtype=jnp.float32)    # cluster centers

    z, q = adaptive_clustering_forward(x, w1, b1, w2, b2, mu)
    jax.block_until_ready((z, q))

    z_ref, q_ref = reference_forward(x, w1, b1, w2, b2, mu)
    # Tolerances account for bf16 MXU operands + approximate EUP reciprocal in the
    # Student-t term (the reference is pure f32, matching the PyTorch module).
    assert jnp.allclose(z, z_ref, atol=5e-2, rtol=5e-2), "z mismatch"
    assert jnp.allclose(q, q_ref, atol=2e-2, rtol=1e-1), "q mismatch"
    # Row normalization uses an exact divide -> rows sum to 1 to f32 precision.
    assert jnp.allclose(jnp.sum(q, axis=1), 1.0, atol=1e-5), "q rows must sum to 1"

    print("KERNEL_OK")
</pallas_src>

<mosaic_0001>
module attributes {stable_mosaic.version = 11 : i64} {
  func.func @_adaptive_clustering_kernel(%arg0: i32, %arg1: memref<8x64xf32, #tpu.memory_space<vmem>>, %arg2: memref<64x32xbf16, #tpu.memory_space<vmem>>, %arg3: memref<1x32xf32, #tpu.memory_space<vmem>>, %arg4: memref<32x16xbf16, #tpu.memory_space<vmem>>, %arg5: memref<1x16xf32, #tpu.memory_space<vmem>>, %arg6: memref<16x8xbf16, #tpu.memory_space<vmem>>, %arg7: memref<1x8xf32, #tpu.memory_space<vmem>>, %arg8: memref<8x16xf32, #tpu.memory_space<vmem>>, %arg9: memref<8x8xf32, #tpu.memory_space<vmem>>) attributes {dimension_semantics = [#tpu.dimension_semantics<parallel>], iteration_bounds = array<i64: 1>, scalar_prefetch = 0 : i64, scratch_operands = 0 : i64, tpu.core_type = #tpu.core_type<tc>, window_params = [{transform_indices = @transform_0, window_bounds = array<i64: 8, 64>}, {pipeline_mode = #tpu.pipeline_mode<synchronous>, transform_indices = @transform_1, window_bounds = array<i64: 64, 32>}, {pipeline_mode = #tpu.pipeline_mode<synchronous>, transform_indices = @transform_2, window_bounds = array<i64: 1, 32>}, {pipeline_mode = #tpu.pipeline_mode<synchronous>, transform_indices = @transform_3, window_bounds = array<i64: 32, 16>}, {pipeline_mode = #tpu.pipeline_mode<synchronous>, transform_indices = @transform_4, window_bounds = array<i64: 1, 16>}, {pipeline_mode = #tpu.pipeline_mode<synchronous>, transform_indices = @transform_5, window_bounds = array<i64: 16, 8>}, {pipeline_mode = #tpu.pipeline_mode<synchronous>, transform_indices = @transform_6, window_bounds = array<i64: 1, 8>}, {transform_indices = @transform_7, window_bounds = array<i64: 8, 16>}, {transform_indices = @transform_8, window_bounds = array<i64: 8, 8>}]} {
    %c0 = arith.constant 0 : index
    %c0_0 = arith.constant 0 : index
    %0 = vector.load %arg1[%c0, %c0_0] : memref<8x64xf32, #tpu.memory_space<vmem>>, vector<8x64xf32>
    %1 = arith.truncf %0 : vector<8x64xf32> to vector<8x64xbf16>
    %c0_1 = arith.constant 0 : index
    %c0_2 = arith.constant 0 : index
    %2 = vector.load %arg2[%c0_1, %c0_2] : memref<64x32xbf16, #tpu.memory_space<vmem>>, vector<64x32xbf16>
    %cst = arith.constant dense<0.000000e+00> : vector<8x32xf32>
    %3 = tpu.matmul %1, %2, %cst {dimension_numbers = #tpu.dot_dimension_numbers<[1], [0], [0], [1], [0, 0, 1, 1], [], []>} : vector<8x64xbf16>, vector<64x32xbf16>, vector<8x32xf32> -> vector<8x32xf32>
    %c0_3 = arith.constant 0 : index
    %c0_4 = arith.constant 0 : index
    %4 = vector.load %arg3[%c0_3, %c0_4] : memref<1x32xf32, #tpu.memory_space<vmem>>, vector<1x32xf32>
    %5 = vector.broadcast %4 : vector<1x32xf32> to vector<8x32xf32>
    %6 = arith.addf %3, %5 : vector<8x32xf32>
    %cst_5 = arith.constant 0.000000e+00 : f32
    %7 = vector.broadcast %cst_5 : f32 to vector<8x32xf32>
    %8 = arith.maximumf %6, %7 : vector<8x32xf32>
    %9 = arith.truncf %8 : vector<8x32xf32> to vector<8x32xbf16>
    %c0_6 = arith.constant 0 : index
    %c0_7 = arith.constant 0 : index
    %10 = vector.load %arg4[%c0_6, %c0_7] : memref<32x16xbf16, #tpu.memory_space<vmem>>, vector<32x16xbf16>
    %cst_8 = arith.constant dense<0.000000e+00> : vector<8x16xf32>
    %11 = tpu.matmul %9, %10, %cst_8 {dimension_numbers = #tpu.dot_dimension_numbers<[1], [0], [0], [1], [0, 0, 1, 1], [], []>} : vector<8x32xbf16>, vector<32x16xbf16>, vector<8x16xf32> -> vector<8x16xf32>
    %c0_9 = arith.constant 0 : index
    %c0_10 = arith.constant 0 : index
    %12 = vector.load %arg5[%c0_9, %c0_10] : memref<1x16xf32, #tpu.memory_space<vmem>>, vector<1x16xf32>
    %13 = vector.broadcast %12 : vector<1x16xf32> to vector<8x16xf32>
    %14 = arith.addf %11, %13 : vector<8x16xf32>
    %c0_11 = arith.constant 0 : index
    %c0_12 = arith.constant 0 : index
    %15 = vector.load %arg8[%c0_11, %c0_12] : memref<8x16xf32, #tpu.memory_space<vmem>>, vector<8x16xf32>
    tpu.vector_store %arg8[%c0_11, %c0_12], %14 {strides = array<i32>} : memref<8x16xf32, #tpu.memory_space<vmem>>, vector<8x16xf32>,
    %16 = arith.mulf %14, %14 : vector<8x16xf32>
    %cst_13 = arith.constant dense<0.000000e+00> : vector<8xf32>
    %17 = vector.multi_reduction <add>, %16, %cst_13 [1] : vector<8x16xf32> to vector<8xf32>
    %18 = vector.shape_cast %17 : vector<8xf32> to vector<8x1xf32>
    %19 = arith.truncf %14 : vector<8x16xf32> to vector<8x16xbf16>
    %c0_14 = arith.constant 0 : index
    %c0_15 = arith.constant 0 : index
    %20 = vector.load %arg6[%c0_14, %c0_15] : memref<16x8xbf16, #tpu.memory_space<vmem>>, vector<16x8xbf16>
    %cst_16 = arith.constant dense<0.000000e+00> : vector<8x8xf32>
    %21 = tpu.matmul %19, %20, %cst_16 {dimension_numbers = #tpu.dot_dimension_numbers<[1], [0], [0], [1], [0, 0, 1, 1], [], []>} : vector<8x16xbf16>, vector<16x8xbf16>, vector<8x8xf32> -> vector<8x8xf32>
    %c0_17 = arith.constant 0 : index
    %c0_18 = arith.constant 0 : index
    %22 = vector.load %arg7[%c0_17, %c0_18] : memref<1x8xf32, #tpu.memory_space<vmem>>, vector<1x8xf32>
    %23 = vector.broadcast %18 : vector<8x1xf32> to vector<8x8xf32>
    %24 = vector.broadcast %22 : vector<1x8xf32> to vector<8x8xf32>
    %25 = arith.addf %23, %24 : vector<8x8xf32>
    %cst_19 = arith.constant 2.000000e+00 : f32
    %26 = vector.broadcast %cst_19 : f32 to vector<8x8xf32>
    %27 = arith.mulf %26, %21 : vector<8x8xf32>
    %28 = arith.subf %25, %27 : vector<8x8xf32>
    %cst_20 = arith.constant 0.000000e+00 : f32
    %29 = vector.broadcast %cst_20 : f32 to vector<8x8xf32>
    %30 = arith.maximumf %28, %29 : vector<8x8xf32>
    %cst_21 = arith.constant 1.000000e+00 : f32
    %31 = vector.broadcast %cst_21 : f32 to vector<8x8xf32>
    %32 = arith.mulf %30, %31 : vector<8x8xf32>
    %cst_22 = arith.constant 1.000000e+00 : f32
    %33 = vector.broadcast %cst_22 : f32 to vector<8x8xf32>
    %34 = arith.addf %33, %32 : vector<8x8xf32>
    %35 = tpu.reciprocal %34 {approx = true} : vector<8x8xf32> -> vector<8x8xf32>
    %36 = arith.mulf %35, %35 : vector<8x8xf32>
    %cst_23 = arith.constant dense<0.000000e+00> : vector<8xf32>
    %37 = vector.multi_reduction <add>, %36, %cst_23 [1] : vector<8x8xf32> to vector<8xf32>
    %38 = vector.shape_cast %37 : vector<8xf32> to vector<8x1xf32>
    %39 = vector.broadcast %38 : vector<8x1xf32> to vector<8x8xf32>
    %40 = arith.divf %36, %39 : vector<8x8xf32>
    %c0_24 = arith.constant 0 : index
    %c0_25 = arith.constant 0 : index
    %41 = vector.load %arg9[%c0_24, %c0_25] : memref<8x8xf32, #tpu.memory_space<vmem>>, vector<8x8xf32>
    tpu.vector_store %arg9[%c0_24, %c0_25], %40 {strides = array<i32>} : memref<8x8xf32, #tpu.memory_space<vmem>>, vector<8x8xf32>,
    return
  }
  func.func @transform_0(%arg0: i32) -> (i32, i32) {
    %c0_i32 = arith.constant 0 : i32
    %c0_i32_0 = arith.constant 0 : i32
    return %arg0, %c0_i32 : i32, i32
  }
  func.func @transform_1(%arg0: i32) -> (i32, i32) {
    %c0_i32 = arith.constant 0 : i32
    %c0_i32_0 = arith.constant 0 : i32
    %c0_i32_1 = arith.constant 0 : i32
    return %c0_i32, %c0_i32_0 : i32, i32
  }
  func.func @transform_2(%arg0: i32) -> (i32, i32) {
    %c0_i32 = arith.constant 0 : i32
    %c0_i32_0 = arith.constant 0 : i32
    %c0_i32_1 = arith.constant 0 : i32
    return %c0_i32, %c0_i32_0 : i32, i32
  }
  func.func @transform_3(%arg0: i32) -> (i32, i32) {
    %c0_i32 = arith.constant 0 : i32
    %c0_i32_0 = arith.constant 0 : i32
    %c0_i32_1 = arith.constant 0 : i32
    return %c0_i32, %c0_i32_0 : i32, i32
  }
  func.func @transform_4(%arg0: i32) -> (i32, i32) {
    %c0_i32 = arith.constant 0 : i32
    %c0_i32_0 = arith.constant 0 : i32
    %c0_i32_1 = arith.constant 0 : i32
    return %c0_i32, %c0_i32_0 : i32, i32
  }
  func.func @transform_5(%arg0: i32) -> (i32, i32) {
    %c0_i32 = arith.constant 0 : i32
    %c0_i32_0 = arith.constant 0 : i32
    %c0_i32_1 = arith.constant 0 : i32
    return %c0_i32, %c0_i32_0 : i32, i32
  }
  func.func @transform_6(%arg0: i32) -> (i32, i32) {
    %c0_i32 = arith.constant 0 : i32
    %c0_i32_0 = arith.constant 0 : i32
    %c0_i32_1 = arith.constant 0 : i32
    return %c0_i32, %c0_i32_0 : i32, i32
  }
  func.func @transform_7(%arg0: i32) -> (i32, i32) {
    %c0_i32 = arith.constant 0 : i32
    %c0_i32_0 = arith.constant 0 : i32
    return %arg0, %c0_i32 : i32, i32
  }
  func.func @transform_8(%arg0: i32) -> (i32, i32) {
    %c0_i32 = arith.constant 0 : i32
    %c0_i32_0 = arith.constant 0 : i32
    return %arg0, %c0_i32 : i32, i32
  }
}

</mosaic_0001>

<llo_original>
// kernel: tpu_custom_call.1
$region0: #{tpu_custom_call.1}
  #allocation0 [shape = 'u32[]', space=smem, size = 0x4, offset = 0x4, fixed_abs, tag = 'smem constant byte address 0x4 - core index']
  #allocation1 [shape = 'u32[144,128]{1,0:T(1,128)}', space=vmem, size = 0x12000, scoped, tag = 'internal scratch']
  %s0 = inlined_call_operand.vmem [shape: f32[8,64], index: 0, kind: input, shape index: {}]
  %s1 = inlined_call_operand.vmem [shape: bf16[64,32], index: 1, kind: input, shape index: {}]
  %s2 = inlined_call_operand.vmem [shape: f32[1,32], index: 2, kind: input, shape index: {}]
  %s3 = inlined_call_operand.vmem [shape: bf16[32,16], index: 3, kind: input, shape index: {}]
  %s4 = inlined_call_operand.vmem [shape: f32[1,16], index: 4, kind: input, shape index: {}]
  %s5 = inlined_call_operand.vmem [shape: bf16[16,8], index: 5, kind: input, shape index: {}]
  %s6 = inlined_call_operand.vmem [shape: f32[1,8], index: 6, kind: input, shape index: {}]
  %s7 = inlined_call_operand.hbm [shape: f32[8,16], index: 7, kind: output, shape index: {0}]
  %s8 = inlined_call_operand.hbm [shape: f32[8,8], index: 8, kind: output, shape index: {1}]
  %9 = xla_tuple %s7, %s8
  %s10 = sld [smem:[#allocation0]]
  $region46: #{tpu_custom_call.1} parent=0
    _
  %s12 = ssub.s32 1, %s10
  %s13 = scalar_select 0, %s12, %s10
  $region1: #{tpu_custom_call.1} parent=0
    #allocation2 [shape = 'u8[4096]{0}', space=vmem, size = 0x1000, scoped, tag = 'output window, operand 0, single buffered']
    #allocation3 [shape = 's32[1]{0}', space=sflag, size = 0x4, scoped, tag = 'scoped memory for tpu_custom_call.1']
    #allocation4 [shape = 'u8[4096]{0}', space=vmem, size = 0x1000, scoped, tag = 'output window, operand 1, single buffered']
    #allocation5 [shape = 's32[1]{0}', space=sflag, size = 0x4, scoped, tag = 'scoped memory for tpu_custom_call.1']
    %14 = vsyncpa [#allocation3], 0
    %15 = vsyncpa [#allocation5], 0
    // Predicated region
    $region2: #{tpu_custom_call.1} parent=1 // pred_check
      _
    $region3: #{tpu_custom_call.1} parent=1 // pred_check_branch
      %17 = sbr.rel (0) target = $region5
    $region4: #{tpu_custom_call.1} parent=1 // pred_region
      _
    $region5: #{tpu_custom_call.1} parent=1 // pred_fallthru
      _
    // Predicated region
    $region6: #{tpu_custom_call.1} parent=1 // pred_check
      _
    $region7: #{tpu_custom_call.1} parent=1 // pred_check_branch
      %19 = sbr.rel (0) target = $region9
    $region8: #{tpu_custom_call.1} parent=1 // pred_region
      _
    $region9: #{tpu_custom_call.1} parent=1 // pred_fallthru
      _
    // Predicated region
    $region10: #{tpu_custom_call.1} parent=1 // pred_check
      _
    $region11: #{tpu_custom_call.1} parent=1 // pred_check_branch
      %21 = sbr.rel (0) target = $region13
    $region12: #{tpu_custom_call.1} parent=1 // pred_region
      _
    $region13: #{tpu_custom_call.1} parent=1 // pred_fallthru
      _
    // Predicated region
    $region14: #{tpu_custom_call.1} parent=1 // pred_check
      _
    $region15: #{tpu_custom_call.1} parent=1 // pred_check_branch
      %23 = sbr.rel (0) target = $region17
    $region16: #{tpu_custom_call.1} parent=1 // pred_region
      _
    $region17: #{tpu_custom_call.1} parent=1 // pred_fallthru
      _
    // Predicated region
    $region18: #{tpu_custom_call.1} parent=1 // pred_check
      _
    $region19: #{tpu_custom_call.1} parent=1 // pred_check_branch
      %25 = sbr.rel (0) target = $region21
    $region20: #{tpu_custom_call.1} parent=1 // pred_region
      _
    $region21: #{tpu_custom_call.1} parent=1 // pred_fallthru
      _
    // Predicated region
    $region22: #{tpu_custom_call.1} parent=1 // pred_check
      _
    $region23: #{tpu_custom_call.1} parent=1 // pred_check_branch
      %27 = sbr.rel (0) target = $region25
    $region24: #{tpu_custom_call.1} parent=1 // pred_region
      _
    $region25: #{tpu_custom_call.1} parent=1 // pred_fallthru
      _
    // Predicated region
    $region26: #{tpu_custom_call.1} parent=1 // pred_check
      _
    $region27: #{tpu_custom_call.1} parent=1 // pred_check_branch
      %29 = sbr.rel (0) target = $region29
    $region28: #{tpu_custom_call.1} parent=1 // pred_region
      _
    $region29: #{tpu_custom_call.1} parent=1 // pred_fallthru
      _
    %v31 = vld [vmem:[%s0] sm:$0xff]
    %v32 = vpack.c.bf16 %v31, %v31
    %v33 = vld [vmem:[%s1] sm:$0xf]
    %v34 = vld [vmem:[%s1 + $0x4] sm:$0xf]
    %v35 = vld [vmem:[%s1 + $0x8] sm:$0xf]
    %v36 = vld [vmem:[%s1 + $0xc] sm:$0xf]
    %v37 = vld [vmem:[%s1 + $0x10] sm:$0xf]
    %v38 = vld [vmem:[%s1 + $0x14] sm:$0xf]
    %v39 = vld [vmem:[%s1 + $0x18] sm:$0xf]
    %v40 = vld [vmem:[%s1 + $0x1c] sm:$0xf]
    %v41 = vld [vmem:[%s2] sm:$0x1]
    %v43 = vlaneseq
    %v44 = vshrl.u32 %v43, 7
    %v45 = vsub.s32 0, %v44
    %v46 = vrot.slane %v41, %v45
    %v56 = vunpack.c.l.b16 %v33
    %v57 = vunpack.c.l.b16 %v34
    %v58 = vunpack.c.l.b16 %v35
    %v59 = vunpack.c.l.b16 %v36
    %v60 = vunpack.c.l.b16 %v37
    %v61 = vunpack.c.l.b16 %v38
    %v62 = vunpack.c.l.b16 %v39
    %v63 = vunpack.c.l.b16 %v40
    %v64 = vpack.c.b16 %v57, %v56
    %v65 = vpack.c.b16 %v59, %v58
    %v66 = vpack.c.b16 %v61, %v60
    %v67 = vpack.c.b16 %v63, %v62
    %vm72 = vcmask 523264
    %v74 = vsel %vm72, %v32, 0
    %76 = vmatprep.subr.bf16.mxu0 0
    %77 = vmatpush1.bf16.msra.mxu0 %v64
    %78 = vmatprep.subr.bf16.mxu0 0
    %79 = vmatpush1.bf16.msra.mxu0 %v65
    %80 = vmatprep.subr.bf16.mxu0 0
    %81 = vmatpush1.bf16.msra.mxu0 %v66
    %82 = vmatprep.subr.bf16.mxu0 0
    %83 = vmatpush1.bf16.msra.mxu0 %v67
    %84 = vmatprep.subr.bf16.mxu0 0
    %85 = vmatpush1.bf16.msra.mxu0 0
    %86 = vmatprep.subr.bf16.mxu0 0
    %87 = vmatpush1.bf16.msra.mxu0 0
    %88 = vmatprep.subr.bf16.mxu0 0
    %89 = vmatpush1.bf16.msra.mxu0 0
    %90 = vmatprep.subr.bf16.mxu0 0
    %91 = vmatpush1.bf16.msra.mxu0 0
    %92 = vmatprep.subr.bf16.mxu0 0
    %93 = vmatpush1.bf16.msra.mxu0 0
    %94 = vmatprep.subr.bf16.mxu0 0
    %95 = vmatpush1.bf16.msra.mxu0 0
    %96 = vmatprep.subr.bf16.mxu0 0
    %97 = vmatpush1.bf16.msra.mxu0 0
    %98 = vmatprep.subr.bf16.mxu0 0
    %99 = vmatpush1.bf16.msra.mxu0 0
    %100 = vmatprep.subr.bf16.mxu0 0
    %101 = vmatpush1.bf16.msra.mxu0 0
    %102 = vmatprep.subr.bf16.mxu0 0
    %103 = vmatpush1.bf16.msra.mxu0 0
    %104 = vmatprep.subr.bf16.mxu0 0
    %105 = vmatpush1.bf16.msra.mxu0 0
    %106 = vmatprep.subr.bf16.mxu0 0
    %107 = vmatpush1.bf16.msra.mxu0 0
    %108 = vmatprep.mubr.bf16.mxu0 0
    %109 = vmatmul.mubr.bf16.gmra.mrb[0].mxu0 %v74
    %v110 = vpop.f32.mrb[0].mxu0
    %v111 = vadd.f32 %v46, %v110
    %v112 = vpop.f32.mrb[0].mxu0
    %v113 = vpop.f32.mrb[0].mxu0
    %v114 = vpop.f32.mrb[0].mxu0
    %115 = vdwg.mxu0
    %v116 = vmax.f32 %v111, 0.0
    %v117 = vpack.c.bf16 %v116, %v116
    %v118 = vld [vmem:[%s3] sm:$0xf]
    %v119 = vld [vmem:[%s3 + $0x4] sm:$0xf]
    %v120 = vld [vmem:[%s3 + $0x8] sm:$0xf]
    %v121 = vld [vmem:[%s3 + $0xc] sm:$0xf]
    %v122 = vld [vmem:[%s4] sm:$0x1]
    %v124 = vlaneseq
    %v125 = vshrl.u32 %v124, 7
    %v126 = vsub.s32 0, %v125
    %v127 = vrot.slane %v122, %v126
    %v133 = vunpack.c.l.b16 %v118
    %v134 = vunpack.c.l.b16 %v119
    %v135 = vunpack.c.l.b16 %v120
    %v136 = vunpack.c.l.b16 %v121
    %v137 = vpack.c.b16 %v134, %v133
    %v138 = vpack.c.b16 %v136, %v135
    %vm141 = vcmask 261120
    %v143 = vsel %vm141, %v117, 0
    %145 = vmatprep.subr.bf16.mxu0 0
    %146 = vmatpush1.bf16.msra.mxu0 %v137
    %147 = vmatprep.subr.bf16.mxu0 0
    %148 = vmatpush1.bf16.msra.mxu0 %v138
    %149 = vmatprep.subr.bf16.mxu0 0
    %150 = vmatpush1.bf16.msra.mxu0 0
    %151 = vmatprep.subr.bf16.mxu0 0
    %152 = vmatpush1.bf16.msra.mxu0 0
    %153 = vmatprep.subr.bf16.mxu0 0
    %154 = vmatpush1.bf16.msra.mxu0 0
    %155 = vmatprep.subr.bf16.mxu0 0
    %156 = vmatpush1.bf16.msra.mxu0 0
    %157 = vmatprep.subr.bf16.mxu0 0
    %158 = vmatpush1.bf16.msra.mxu0 0
    %159 = vmatprep.subr.bf16.mxu0 0
    %160 = vmatpush1.bf16.msra.mxu0 0
    %161 = vmatprep.subr.bf16.mxu0 0
    %162 = vmatpush1.bf16.msra.mxu0 0
    %163 = vmatprep.subr.bf16.mxu0 0
    %164 = vmatpush1.bf16.msra.mxu0 0
    %165 = vmatprep.subr.bf16.mxu0 0
    %166 = vmatpush1.bf16.msra.mxu0 0
    %167 = vmatprep.subr.bf16.mxu0 0
    %168 = vmatpush1.bf16.msra.mxu0 0
    %169 = vmatprep.subr.bf16.mxu0 0
    %170 = vmatpush1.bf16.msra.mxu0 0
    %171 = vmatprep.subr.bf16.mxu0 0
    %172 = vmatpush1.bf16.msra.mxu0 0
    %173 = vmatprep.subr.bf16.mxu0 0
    %174 = vmatpush1.bf16.msra.mxu0 0
    %175 = vmatprep.subr.bf16.mxu0 0
    %176 = vmatpush1.bf16.msra.mxu0 0
    %177 = vmatprep.mubr.bf16.mxu0 0
    %178 = vmatmul.mubr.bf16.gmra.mrb[0].mxu0 %v143
    %v179 = vpop.f32.mrb[0].mxu0
    %v180 = vadd.f32 %v127, %v179
    %v181 = vpop.f32.mrb[0].mxu0
    %v182 = vpop.f32.mrb[0].mxu0
    %v183 = vpop.f32.mrb[0].mxu0
    %184 = vdwg.mxu0
    %vm185 = vcmask 130048
    %186 = vst.msk [vmem:[#allocation2] sm:$0xff] %vm185, %v180
    %v187 = vmul.f32 %v180, %v180
    %v188 = vsel %vm185, %v187, 0.0
    %189 = vadd.xlane.f32.xlu0 %v188
    %v190 = vpop.xlane.xlu0 %189
    %v191 = vpack.c.bf16 %v180, %v180
    %v192 = vld [vmem:[%s5] sm:$0xf]
    %v193 = vld [vmem:[%s5 + $0x4] sm:$0xf]
    %v196 = vunpack.c.l.b16 %v192
    %v197 = vunpack.c.l.b16 %v193
    %v198 = vpack.c.b16 %v197, %v196
    %v201 = vsel %vm185, %v191, 0
    %203 = vmatprep.subr.bf16.mxu0 0
    %204 = vmatpush1.bf16.msra.mxu0 %v198
    %205 = vmatprep.subr.bf16.mxu0 0
    %206 = vmatpush1.bf16.msra.mxu0 0
    %207 = vmatprep.subr.bf16.mxu0 0
    %208 = vmatpush1.bf16.msra.mxu0 0
    %209 = vmatprep.subr.bf16.mxu0 0
    %210 = vmatpush1.bf16.msra.mxu0 0
    %211 = vmatprep.subr.bf16.mxu0 0
    %212 = vmatpush1.bf16.msra.mxu0 0
    %213 = vmatprep.subr.bf16.mxu0 0
    %214 = vmatpush1.bf16.msra.mxu0 0
    %215 = vmatprep.subr.bf16.mxu0 0
    %216 = vmatpush1.bf16.msra.mxu0 0
    %217 = vmatprep.subr.bf16.mxu0 0
    %218 = vmatpush1.bf16.msra.mxu0 0
    %219 = vmatprep.subr.bf16.mxu0 0
    %220 = vmatpush1.bf16.msra.mxu0 0
    %221 = vmatprep.subr.bf16.mxu0 0
    %222 = vmatpush1.bf16.msra.mxu0 0
    %223 = vmatprep.subr.bf16.mxu0 0
    %224 = vmatpush1.bf16.msra.mxu0 0
    %225 = vmatprep.subr.bf16.mxu0 0
    %226 = vmatpush1.bf16.msra.mxu0 0
    %227 = vmatprep.subr.bf16.mxu0 0
    %228 = vmatpush1.bf16.msra.mxu0 0
    %229 = vmatprep.subr.bf16.mxu0 0
    %230 = vmatpush1.bf16.msra.mxu0 0
    %231 = vmatprep.subr.bf16.mxu0 0
    %232 = vmatpush1.bf16.msra.mxu0 0
    %233 = vmatprep.subr.bf16.mxu0 0
    %234 = vmatpush1.bf16.msra.mxu0 0
    %235 = vmatprep.mubr.bf16.mxu0 0
    %236 = vmatmul.mubr.bf16.gmra.mrb[0].mxu0 %v201
    %v237 = vpop.f32.mrb[0].mxu0
    %v238 = vadd.f32 0.0, %v237
    %v239 = vpop.f32.mrb[0].mxu0
    %v240 = vpop.f32.mrb[0].mxu0
    %v241 = vpop.f32.mrb[0].mxu0
    %242 = vdwg.mxu0
    %v243 = vld [vmem:[%s6] sm:$0x1]
    %v245 = vlaneseq
    %v246 = vshrl.u32 %v245, 7
    %v247 = vsub.s32 0, %v246
    %v248 = vrot.slane %v243, %v247
    %v250 = vadd.f32 %v190, %v248
    %v251 = vmul.f32 %v238, 2.0
    %v252 = vsub.f32 %v250, %v251
    %v253 = vmax.f32 %v252, 0.0
    %v254 = vadd.f32 %v253, 1.0
    %v255 = vrcp.pop %v254
    %v256 = vmul.f32 %v255, %v255
    %vm257 = vcmask 64512
    %v258 = vsel %vm257, %v256, 0.0
    %259 = vadd.xlane.f32.xlu0 %v258
    %v260 = vpop.xlane.xlu0 %259
    %v261 = vrcp.pop %v260
    %v262 = vmul.f32 %v256, %v261
    %263 = vst.msk [vmem:[#allocation4] sm:$0xff] %vm257, %v262
    // Predicated region
    $region30: #{tpu_custom_call.1} parent=1 // pred_check
      _
    $region31: #{tpu_custom_call.1} parent=1 // pred_check_branch
      %265 = sbr.rel (0) target = $region33
    $region32: #{tpu_custom_call.1} parent=1 // pred_region
      %s267 = ssub.s32 128, 128
      %268 = vsyncadd [#allocation3], %s267
      %s270 = sshll.u32 [#allocation2], 4
      %s271 = int_to_ptr.vmem [resolvable:$true] %s270
      %273 = dma.vmem_to_hbm [thread:$0]  %s271, 128, %s7, [#allocation3]
    $region33: #{tpu_custom_call.1} parent=1 // pred_fallthru
      _
    // Predicated region
    $region34: #{tpu_custom_call.1} parent=1 // pred_check
      _
    $region35: #{tpu_custom_call.1} parent=1 // pred_check_branch
      %275 = sbr.rel (0) target = $region37
    $region36: #{tpu_custom_call.1} parent=1 // pred_region
      %s277 = ssub.s32 128, 128
      %278 = vsyncadd [#allocation5], %s277
      %s280 = sshll.u32 [#allocation4], 4
      %s281 = int_to_ptr.vmem [resolvable:$true] %s280
      %283 = dma.vmem_to_hbm [thread:$0]  %s281, 128, %s8, [#allocation5]
    $region37: #{tpu_custom_call.1} parent=1 // pred_fallthru
      _
    // Predicated region
    $region38: #{tpu_custom_call.1} parent=1 // pred_check
      _
    $region39: #{tpu_custom_call.1} parent=1 // pred_check_branch
      %285 = sbr.rel (0) target = $region41
    $region40: #{tpu_custom_call.1} parent=1 // pred_region
      %286 = dma.done [#allocation3], 128
    $region41: #{tpu_custom_call.1} parent=1 // pred_fallthru
      _
    // Predicated region
    $region42: #{tpu_custom_call.1} parent=1 // pred_check
      _
    $region43: #{tpu_custom_call.1} parent=1 // pred_check_branch
      %288 = sbr.rel (0) target = $region45
    $region44: #{tpu_custom_call.1} parent=1 // pred_region
      %289 = dma.done [#allocation5], 128
    $region45: #{tpu_custom_call.1} parent=1 // pred_fallthru
      _
    %290 = vsyncpa [#allocation3], 1
    %291 = vsyncpa [#allocation5], 1

</llo_original>
